<compile_context>
chip_gen: v6e
topology: v6e:2x2x1
jax: 0.10.0
libtpu: 0.0.40
codegen_flags: <defaults>
</compile_context>

<pallas_src>
import jax
import jax.numpy as jnp
from jax.experimental import pallas as pl
from jax.experimental.pallas import tpu as pltpu

_MiB = 1024 * 1024


def _round_up(x, m):
    return ((x + m - 1) // m) * m


def _vmem_limit_bytes():
    """Per-generation scoped-VMEM limit (v5e/v6e: 128 MiB physical, v7x: 64 MiB)."""
    phys = None
    try:
        info = pltpu.get_tpu_info()
        for name in ("vmem_capacity_bytes", "vmem_size_bytes", "vmem_bytes"):
            v = getattr(info, name, None)
            if v is not None and int(v) > 0:
                phys = int(v)
                break
    except Exception:
        phys = None
    if phys is not None and phys >= 96 * _MiB:
        return 80 * _MiB      # v5e / v6e: raise well above the 16/32 MiB default
    return 48 * _MiB          # v7x (64 MiB physical) or unknown: stay tight


def _pick_row_tile(bc, hw, itemsize, n_layers, sublane, budget_bytes, min_tiles=2):
    """Largest sublane-aligned row tile whose TOTAL live VMEM (all layers, all
    double-buffers, lane padding included) fits the budget; forces >= min_tiles
    grid steps when the row count allows it (keeps both v7x TCs busy)."""
    hw_pad = _round_up(hw, 128)
    # Worst pass (scale): per layer 2 x-blocks + 2 out-blocks (lane-padded HW)
    # + 2 lane-padded [rows,1] f32 attention blocks.
    per_row = n_layers * 4 * hw_pad * itemsize + n_layers * 2 * 128 * 4
    budget_rows = max(sublane, budget_bytes // per_row)
    if bc >= min_tiles * sublane:
        split_rows = _round_up(-(-bc // min_tiles), sublane)
    else:
        split_rows = bc
    rows = min(budget_rows, split_rows, bc)
    if rows >= bc:
        return bc                               # full extent (always legal)
    return max(sublane, (rows // sublane) * sublane)
    # TODO(synk): if even `sublane` rows exceed the budget (extremely large
    # H*W * L), additionally tile the HW axis with a trailing "arbitrary" grid
    # dim and a VMEM partial-sum scratch in the mean kernel.


# ---------------- Kernel A: fused per-layer spatial means ---------------------
def _make_mean_kernel(n_layers):
    def kernel(*refs):
        # refs: x_0..x_{L-1} each [TBC, HW]; mean_ref [L, TBC, 1] (f32)
        x_refs, mean_ref = refs[:n_layers], refs[n_layers]
        for l in range(n_layers):
            mean_ref[l, :, :] = jnp.mean(
                x_refs[l][...].astype(jnp.float32), axis=-1, keepdims=True)
    return kernel


# --------------- Kernel C: fused per-layer attention scaling ------------------
def _make_scale_kernel(n_layers):
    def kernel(*refs):
        # refs: attn [L, TBC, 1] (f32), x_0..x_{L-1} [TBC, HW], o_0..o_{L-1}
        attn_ref = refs[0]
        x_refs = refs[1:1 + n_layers]
        o_refs = refs[1 + n_layers:1 + 2 * n_layers]
        for l in range(n_layers):
            a = attn_ref[l, :, :]                        # [TBC,1] -> VPU splat
            o_refs[l][...] = (x_refs[l][...] * a).astype(o_refs[l].dtype)
    return kernel


def sffm_forward(input_list, weight, *, donate_inputs=False):
    """input_list: list of [B, C, H, W] arrays (same shape/dtype);
    weight: [C, C] PyTorch nn.Linear weight (y = x @ weight.T, bias=False)."""
    L = len(input_list)
    B, C, H, W = input_list[0].shape
    BC, HW = B * C, H * W
    dtype = input_list[0].dtype
    itemsize = jnp.dtype(dtype).itemsize
    sublane = max(8, 32 // itemsize)           # 8 (f32) / 16 (bf16) / 32 (int8)

    vmem_limit = _vmem_limit_bytes()
    budget = (vmem_limit * 3) // 4             # headroom for compiler scratch
    tbc = _pick_row_tile(BC, HW, itemsize, L, sublane, budget)
    n_tiles = pl.cdiv(BC, tbc)

    cparams = pltpu.CompilerParams(
        dimension_semantics=("parallel",),     # independent row tiles
        vmem_limit_bytes=vmem_limit,
    )

    xs = [x.reshape(BC, HW) for x in input_list]   # free NCHW -> [B*C, H*W] view
    x_spec = pl.BlockSpec((tbc, HW), lambda t: (t, 0))
    side_spec = pl.BlockSpec((L, tbc, 1), lambda t: (0, t, 0))

    # --- Kernel A: all L spatial means in one dispatch ------------------------
    mean_cost = pl.CostEstimate(
        flops=L * BC * HW, transcendentals=0,
        bytes_accessed=L * BC * HW * itemsize + L * BC * 4)
    means3 = pl.pallas_call(
        _make_mean_kernel(L),
        out_shape=jax.ShapeDtypeStruct((L, BC, 1), jnp.float32),
        grid=(n_tiles,),
        in_specs=[x_spec] * L,
        out_specs=side_spec,
        compiler_params=cparams,
        cost_estimate=mean_cost,
    )(*xs)

    # --- Linear (bias=False) + softmax over the layer axis: plain JAX ---------
    # Tiny (L*B*C elements); keeping it out of Pallas avoids a padded MXU push
    # and an extra kernel dispatch (per performance review).
    means = means3.reshape(L, B, C)
    logits = jnp.einsum("lbk,ck->lbc", means, weight.astype(jnp.float32))
    attn = jax.nn.softmax(logits, axis=0)              # softmax over layers
    attn3 = attn.reshape(L, BC, 1)

    # --- Kernel C: all L attention scalings in one dispatch -------------------
    scale_cost = pl.CostEstimate(
        flops=L * BC * HW, transcendentals=0,
        bytes_accessed=2 * L * BC * HW * itemsize + L * BC * 4)
    aliases = {1 + l: l for l in range(L)} if donate_inputs else {}
    outs = pl.pallas_call(
        _make_scale_kernel(L),
        out_shape=[jax.ShapeDtypeStruct((BC, HW), dtype) for _ in range(L)],
        grid=(n_tiles,),
        in_specs=[side_spec] + [x_spec] * L,
        out_specs=[x_spec] * L,
        compiler_params=cparams,
        cost_estimate=scale_cost,
        input_output_aliases=aliases,
    )(attn3, *xs)

    return [o.reshape(B, C, H, W) for o in outs]


# ---------------------------- pure-JAX reference ------------------------------
def sffm_reference(input_list, weight):
    L = len(input_list)
    means = jnp.stack([jnp.mean(t, axis=(2, 3)) for t in input_list], axis=0)  # [L,B,C]
    logits = jnp.einsum("lbk,ck->lbc", means, weight)                          # Linear, no bias
    attn = jax.nn.softmax(logits, axis=0)                                      # over layers
    return [input_list[i] * attn[i][:, :, None, None] for i in range(L)]


if __name__ == "__main__":
    key = jax.random.PRNGKey(0)
    L, B, C, H, W = 3, 2, 8, 16, 16
    keys = jax.random.split(key, L + 1)
    input_list = [
        jax.random.normal(keys[i], (B, C, H, W), dtype=jnp.float32) for i in range(L)
    ]
    # deterministic nn.Linear-style init: U(-1/sqrt(C), 1/sqrt(C)), shape [out, in]
    bound = 1.0 / (C ** 0.5)
    weight = jax.random.uniform(keys[L], (C, C), jnp.float32, -bound, bound)

    outs = sffm_forward(list(input_list), weight)
    outs = jax.block_until_ready(outs)

    refs = sffm_reference(input_list, weight)
    for o, r in zip(outs, refs):
        assert o.shape == r.shape and o.dtype == r.dtype
        assert jnp.allclose(o, r, atol=1e-5, rtol=1e-5)

    print("KERNEL_OK")
</pallas_src>

<mosaic_0001>
module attributes {stable_mosaic.version = 11 : i64} {
  func.func @kernel(%arg0: i32, %arg1: memref<8x256xf32, #tpu.memory_space<vmem>>, %arg2: memref<8x256xf32, #tpu.memory_space<vmem>>, %arg3: memref<8x256xf32, #tpu.memory_space<vmem>>, %arg4: memref<3x8x1xf32, #tpu.memory_space<vmem>>) attributes {dimension_semantics = [#tpu.dimension_semantics<parallel>], iteration_bounds = array<i64: 2>, scalar_prefetch = 0 : i64, scratch_operands = 0 : i64, tpu.core_type = #tpu.core_type<tc>, window_params = [{transform_indices = @transform_0, window_bounds = array<i64: 8, 256>}, {transform_indices = @transform_1, window_bounds = array<i64: 8, 256>}, {transform_indices = @transform_2, window_bounds = array<i64: 8, 256>}, {transform_indices = @transform_3, window_bounds = array<i64: 3, 8, 1>}]} {
    %c0 = arith.constant 0 : index
    %c0_0 = arith.constant 0 : index
    %0 = vector.load %arg1[%c0, %c0_0] : memref<8x256xf32, #tpu.memory_space<vmem>>, vector<8x256xf32>
    %cst = arith.constant dense<0.000000e+00> : vector<8xf32>
    %1 = vector.multi_reduction <add>, %0, %cst [1] : vector<8x256xf32> to vector<8xf32>
    %2 = vector.shape_cast %1 : vector<8xf32> to vector<8x1xf32>
    %cst_1 = arith.constant 2.560000e+02 : f32
    %3 = vector.broadcast %cst_1 : f32 to vector<8x1xf32>
    %4 = arith.divf %2, %3 : vector<8x1xf32>
    %c0_2 = arith.constant 0 : index
    %c0_3 = arith.constant 0 : index
    %c0_4 = arith.constant 0 : index
    %5 = vector.load %arg4[%c0_2, %c0_3, %c0_4] : memref<3x8x1xf32, #tpu.memory_space<vmem>>, vector<1x8x1xf32>
    %6 = vector.shape_cast %5 : vector<1x8x1xf32> to vector<8x1xf32>
    %7 = vector.shape_cast %4 : vector<8x1xf32> to vector<1x8x1xf32>
    tpu.vector_store %arg4[%c0_2, %c0_3, %c0_4], %7 {strides = array<i32>} : memref<3x8x1xf32, #tpu.memory_space<vmem>>, vector<1x8x1xf32>,
    %c0_5 = arith.constant 0 : index
    %c0_6 = arith.constant 0 : index
    %8 = vector.load %arg2[%c0_5, %c0_6] : memref<8x256xf32, #tpu.memory_space<vmem>>, vector<8x256xf32>
    %cst_7 = arith.constant dense<0.000000e+00> : vector<8xf32>
    %9 = vector.multi_reduction <add>, %8, %cst_7 [1] : vector<8x256xf32> to vector<8xf32>
    %10 = vector.shape_cast %9 : vector<8xf32> to vector<8x1xf32>
    %cst_8 = arith.constant 2.560000e+02 : f32
    %11 = vector.broadcast %cst_8 : f32 to vector<8x1xf32>
    %12 = arith.divf %10, %11 : vector<8x1xf32>
    %c1 = arith.constant 1 : index
    %c0_9 = arith.constant 0 : index
    %c0_10 = arith.constant 0 : index
    %13 = vector.load %arg4[%c1, %c0_9, %c0_10] : memref<3x8x1xf32, #tpu.memory_space<vmem>>, vector<1x8x1xf32>
    %14 = vector.shape_cast %13 : vector<1x8x1xf32> to vector<8x1xf32>
    %15 = vector.shape_cast %12 : vector<8x1xf32> to vector<1x8x1xf32>
    tpu.vector_store %arg4[%c1, %c0_9, %c0_10], %15 {strides = array<i32>} : memref<3x8x1xf32, #tpu.memory_space<vmem>>, vector<1x8x1xf32>,
    %c0_11 = arith.constant 0 : index
    %c0_12 = arith.constant 0 : index
    %16 = vector.load %arg3[%c0_11, %c0_12] : memref<8x256xf32, #tpu.memory_space<vmem>>, vector<8x256xf32>
    %cst_13 = arith.constant dense<0.000000e+00> : vector<8xf32>
    %17 = vector.multi_reduction <add>, %16, %cst_13 [1] : vector<8x256xf32> to vector<8xf32>
    %18 = vector.shape_cast %17 : vector<8xf32> to vector<8x1xf32>
    %cst_14 = arith.constant 2.560000e+02 : f32
    %19 = vector.broadcast %cst_14 : f32 to vector<8x1xf32>
    %20 = arith.divf %18, %19 : vector<8x1xf32>
    %c2 = arith.constant 2 : index
    %c0_15 = arith.constant 0 : index
    %c0_16 = arith.constant 0 : index
    %21 = vector.load %arg4[%c2, %c0_15, %c0_16] : memref<3x8x1xf32, #tpu.memory_space<vmem>>, vector<1x8x1xf32>
    %22 = vector.shape_cast %21 : vector<1x8x1xf32> to vector<8x1xf32>
    %23 = vector.shape_cast %20 : vector<8x1xf32> to vector<1x8x1xf32>
    tpu.vector_store %arg4[%c2, %c0_15, %c0_16], %23 {strides = array<i32>} : memref<3x8x1xf32, #tpu.memory_space<vmem>>, vector<1x8x1xf32>,
    return
  }
  func.func @transform_0(%arg0: i32) -> (i32, i32) {
    %c0_i32 = arith.constant 0 : i32
    %c0_i32_0 = arith.constant 0 : i32
    return %arg0, %c0_i32 : i32, i32
  }
  func.func @transform_1(%arg0: i32) -> (i32, i32) {
    %c0_i32 = arith.constant 0 : i32
    %c0_i32_0 = arith.constant 0 : i32
    return %arg0, %c0_i32 : i32, i32
  }
  func.func @transform_2(%arg0: i32) -> (i32, i32) {
    %c0_i32 = arith.constant 0 : i32
    %c0_i32_0 = arith.constant 0 : i32
    return %arg0, %c0_i32 : i32, i32
  }
  func.func @transform_3(%arg0: i32) -> (i32, i32, i32) {
    %c0_i32 = arith.constant 0 : i32
    %c0_i32_0 = arith.constant 0 : i32
    %c0_i32_1 = arith.constant 0 : i32
    return %c0_i32, %arg0, %c0_i32_0 : i32, i32, i32
  }
}

</mosaic_0001>

<llo_original>
// kernel: tpu_custom_call.1
$region0: #{tpu_custom_call.1}
  #allocation0 [shape = 'u32[]', space=smem, size = 0x4, offset = 0x4, fixed_abs, tag = 'smem constant byte address 0x4 - core index']
  #allocation1 [shape = 'u32[144,128]{1,0:T(1,128)}', space=vmem, size = 0x12000, scoped, tag = 'internal scratch']
  %s0 = inlined_call_operand.hbm [shape: f32[16,256], index: 0, kind: input, shape index: {}]
  %s1 = inlined_call_operand.hbm [shape: f32[16,256], index: 1, kind: input, shape index: {}]
  %s2 = inlined_call_operand.hbm [shape: f32[16,256], index: 2, kind: input, shape index: {}]
  %s3 = inlined_call_operand.vmem [shape: f32[3,16,1], index: 3, kind: output, shape index: {}]
  %s4 = sld [smem:[#allocation0]]
  $region91: #{tpu_custom_call.1} parent=0
    _
  %s6 = ssub.s32 1, %s4
  %s7 = scalar_select 0, %s6, %s4
  $region1: #{tpu_custom_call.1} parent=0
    #allocation2 [shape = 'u8[16384]{0}', space=vmem, size = 0x4000, scoped, tag = 'input window, operand 0']
    #allocation3 [shape = 's32[2]{0}', space=sflag, size = 0x8, scoped, tag = 'scoped memory for tpu_custom_call.1']
    #allocation4 [shape = 'u8[16384]{0}', space=vmem, size = 0x4000, scoped, tag = 'input window, operand 1']
    #allocation5 [shape = 's32[2]{0}', space=sflag, size = 0x8, scoped, tag = 'scoped memory for tpu_custom_call.1']
    #allocation6 [shape = 'u8[16384]{0}', space=vmem, size = 0x4000, scoped, tag = 'input window, operand 2']
    #allocation7 [shape = 'u8[24576]{0}', space=vmem, size = 0x6000, scoped, tag = 'output window, operand 0']
    %8 = vsyncpa [#allocation3], 0
    %s9 = scalar_lea.sflag [#allocation3], 1
    %10 = vsyncpa %s9, 0
    %11 = vsyncpa [#allocation5], 0
    %s12 = scalar_lea.sflag [#allocation5], 1
    %13 = vsyncpa %s12, 0
    loop: start=0, step=1, limit=4
    $region2: #{tpu_custom_call.1} parent=1 // loop_pre_header
      _
    $region3: #{tpu_custom_call.1} parent=1 // loop_header
      %s15 = sphi 0, %s19
      %p16 = scmp.ge.s32.totalorder %s15, 4
      %s25 = sphi 0, %s27
      %s28 = sphi 0, %s25
      %s29 = sphi 0, %s28
      %s45 = sphi 0, %s29
      %s51 = sphi 0, %s53
      %s54 = sphi 0, %s51
      %s55 = sphi 0, %s54
      %s71 = sphi 0, %s55
      %s77 = sphi 0, %s79
      %s80 = sphi 0, %s77
      %s81 = sphi 0, %s80
      %s97 = sphi 0, %s81
      %s103 = sphi 0, %s105
      %s106 = sphi 0, %s103
      %s107 = sphi 0, %s106
      %s123 = sphi 0, %s107
    $region4: #{tpu_custom_call.1} parent=1 // loop_header_branch
      %18 = sbr.rel (%p16) target = $region8
    $region5: #{tpu_custom_call.1} parent=1 // loop_body
      %s20 = ssub.s32 %s15, 1
      %s21 = ssub.s32 %s15, 2
      %s22 = sadd.s32 %s15, 1
      %s23 = ssub.s32 %s15, %s22
      %p24 = scmp.eq.s32.totalorder %s23, 0
      %s26 = sadd.s32 %s25, 1
      %s27 = scalar_select %p24, %s25, %s26
      %p30 = pneg %p24
      %p31 = scmp.eq.s32.totalorder %s15, 1
      %p32 = por %p30, %p31
      %p33 = scmp.ne.s32.totalorder %s25, %s28
      %p34 = scmp.eq.s32.totalorder %s15, 0
      %p35 = por %p33, %p34
      %p36 = scmp.ne.s32.totalorder %s25, %s28
      %p37 = scmp.eq.s32.totalorder %s20, 1
      %p38 = por %p36, %p37
      %p39 = scmp.ne.s32.totalorder %s28, %s29
      %p40 = scmp.eq.s32.totalorder %s20, 0
      %p41 = por %p39, %p40
      %p42 = scmp.ne.s32.totalorder %s28, %s29
      %p43 = scmp.eq.s32.totalorder %s21, 1
      %p44 = por %p42, %p43
      %p46 = scmp.ne.s32.totalorder %s29, %s45
      %p47 = scmp.eq.s32.totalorder %s21, 0
      %p48 = por %p46, %p47
      %s49 = ssub.s32 %s15, %s22
      %p50 = scmp.eq.s32.totalorder %s49, 0
      %s52 = sadd.s32 %s51, 1
      %s53 = scalar_select %p50, %s51, %s52
      %p56 = pneg %p50
      %p57 = scmp.eq.s32.totalorder %s15, 1
      %p58 = por %p56, %p57
      %p59 = scmp.ne.s32.totalorder %s51, %s54
      %p60 = scmp.eq.s32.totalorder %s15, 0
      %p61 = por %p59, %p60
      %p62 = scmp.ne.s32.totalorder %s51, %s54
      %p63 = scmp.eq.s32.totalorder %s20, 1
      %p64 = por %p62, %p63
      %p65 = scmp.ne.s32.totalorder %s54, %s55
      %p66 = scmp.eq.s32.totalorder %s20, 0
      %p67 = por %p65, %p66
      %p68 = scmp.ne.s32.totalorder %s54, %s55
      %p69 = scmp.eq.s32.totalorder %s21, 1
      %p70 = por %p68, %p69
      %p72 = scmp.ne.s32.totalorder %s55, %s71
      %p73 = scmp.eq.s32.totalorder %s21, 0
      %p74 = por %p72, %p73
      %s75 = ssub.s32 %s15, %s22
      %p76 = scmp.eq.s32.totalorder %s75, 0
      %s78 = sadd.s32 %s77, 1
      %s79 = scalar_select %p76, %s77, %s78
      %p82 = pneg %p76
      %p83 = scmp.eq.s32.totalorder %s15, 1
      %p84 = por %p82, %p83
      %p85 = scmp.ne.s32.totalorder %s77, %s80
      %p86 = scmp.eq.s32.totalorder %s15, 0
      %p87 = por %p85, %p86
      %p88 = scmp.ne.s32.totalorder %s77, %s80
      %p89 = scmp.eq.s32.totalorder %s20, 1
      %p90 = por %p88, %p89
      %p91 = scmp.ne.s32.totalorder %s80, %s81
      %p92 = scmp.eq.s32.totalorder %s20, 0
      %p93 = por %p91, %p92
      %p94 = scmp.ne.s32.totalorder %s80, %s81
      %p95 = scmp.eq.s32.totalorder %s21, 1
      %p96 = por %p94, %p95
      %p98 = scmp.ne.s32.totalorder %s81, %s97
      %p99 = scmp.eq.s32.totalorder %s21, 0
      %p100 = por %p98, %p99
      %s101 = ssub.s32 %s15, %s22
      %p102 = scmp.eq.s32.totalorder %s101, 0
      %s104 = sadd.s32 %s103, 1
      %s105 = scalar_select %p102, %s103, %s104
      %p108 = pneg %p102
      %p109 = scmp.eq.s32.totalorder %s15, 1
      %p110 = por %p108, %p109
      %p111 = scmp.ne.s32.totalorder %s103, %s106
      %p112 = scmp.eq.s32.totalorder %s15, 0
      %p113 = por %p111, %p112
      %p114 = scmp.ne.s32.totalorder %s103, %s106
      %p115 = scmp.eq.s32.totalorder %s20, 1
      %p116 = por %p114, %p115
      %p117 = scmp.ne.s32.totalorder %s106, %s107
      %p118 = scmp.eq.s32.totalorder %s20, 0
      %p119 = por %p117, %p118
      %p120 = scmp.ne.s32.totalorder %s106, %s107
      %p121 = scmp.eq.s32.totalorder %s21, 1
      %p122 = por %p120, %p121
      %p124 = scmp.ne.s32.totalorder %s107, %s123
      %p125 = scmp.eq.s32.totalorder %s21, 0
      %p126 = por %p124, %p125
      %p127 = scmp.le.s32.totalorder 1, %s15
      %p128 = scmp.lt.s32.totalorder %s15, 3
      %p129 = pnand %p127, %p128
      %p130 = pneg %p129
      // Predicated region
      $region9: #{tpu_custom_call.1} parent=5 // pred_check
        _
      $region10: #{tpu_custom_call.1} parent=5 // pred_check_branch
        %132 = sbr.rel (%p129) target = $region12
      $region11: #{tpu_custom_call.1} parent=5 // pred_region
        %s133 = ssub.s32 %s15, 1
      $region12: #{tpu_custom_call.1} parent=5 // pred_fallthru
        _
      %p134 = scmp.lt.s32.totalorder %s15, 2
      // Predicated region
      $region13: #{tpu_custom_call.1} parent=5 // pred_check
        %p135 = pneg %p134
      $region14: #{tpu_custom_call.1} parent=5 // pred_check_branch
        %137 = sbr.rel (%p135) target = $region16
      $region15: #{tpu_custom_call.1} parent=5 // pred_region
        // Predicated region
        $region17: #{tpu_custom_call.1} parent=15 // pred_check
          %p138 = pneg %p35
        $region18: #{tpu_custom_call.1} parent=15 // pred_check_branch
          %140 = sbr.rel (%p138) target = $region20
        $region19: #{tpu_custom_call.1} parent=15 // pred_region
          %s141 = sand.u32 %s25, 1
          %s142 = scalar_lea.sflag [#allocation3], %s141
          %s143 = sand.u32 %s25, 1
          %s144 = smul.addr %s143, 16
          %s145 = scalar_lea.vmem [#allocation2], %s144
          %s147 = ssub.s32 256, 256
          %148 = vsyncadd %s142, %s147
          %s149 = smul.addr %s15, 2
          %s150 = smul.addr %s149, 128
          %s151 = scalar_lea.hbm %s0, %s150
          %s153 = sshll.u32 %s145, 4
          %s154 = int_to_ptr.vmem [resolvable:$true] %s153
          %156 = dma.hbm_to_vmem [thread:$0]  %s151, 256, %s154, %s142
        $region20: #{tpu_custom_call.1} parent=15 // pred_fallthru
          _
        // Predicated region
        $region21: #{tpu_custom_call.1} parent=15 // pred_check
          %p157 = pneg %p61
        $region22: #{tpu_custom_call.1} parent=15 // pred_check_branch
          %159 = sbr.rel (%p157) target = $region24
        $region23: #{tpu_custom_call.1} parent=15 // pred_region
          %s160 = sand.u32 %s15, 1
          %s161 = scalar_lea.sflag [#allocation5], %s160
          %s162 = sand.u32 %s51, 1
          %s163 = smul.addr %s162, 16
          %s164 = scalar_lea.vmem [#allocation4], %s163
          %s166 = ssub.s32 256, 256
          %167 = vsyncadd %s161, %s166
          %s168 = smul.addr %s15, 2
          %s169 = smul.addr %s168, 128
          %s170 = scalar_lea.hbm %s1, %s169
          %s172 = sshll.u32 %s164, 4
          %s173 = int_to_ptr.vmem [resolvable:$true] %s172
          %175 = dma.hbm_to_vmem [thread:$0]  %s170, 256, %s173, %s161
        $region24: #{tpu_custom_call.1} parent=15 // pred_fallthru
          _
        // Predicated region
        $region25: #{tpu_custom_call.1} parent=15 // pred_check
          %p176 = pneg %p87
        $region26: #{tpu_custom_call.1} parent=15 // pred_check_branch
          %178 = sbr.rel (%p176) target = $region28
        $region27: #{tpu_custom_call.1} parent=15 // pred_region
          %s179 = sand.u32 %s15, 1
          %s180 = scalar_lea.sflag [#allocation5], %s179
          %s181 = sand.u32 %s77, 1
          %s182 = smul.addr %s181, 16
          %s183 = scalar_lea.vmem [#allocation6], %s182
          %s185 = ssub.s32 256, 256
          %186 = vsyncadd %s180, %s185
          %s187 = smul.addr %s15, 2
          %s188 = smul.addr %s187, 128
          %s189 = scalar_lea.hbm %s2, %s188
          %s191 = sshll.u32 %s183, 4
          %s192 = int_to_ptr.vmem [resolvable:$true] %s191
          %194 = dma.hbm_to_vmem [thread:$0]  %s189, 256, %s192, %s180
        $region28: #{tpu_custom_call.1} parent=15 // pred_fallthru
          _
      $region16: #{tpu_custom_call.1} parent=5 // pred_fallthru
        _
      %p195 = scmp.le.s32.totalorder 1, %s15
      %p196 = scmp.lt.s32.totalorder %s15, 3
      %p197 = pnand %p195, %p196
      %p198 = pneg %p197
      // Predicated region
      $region29: #{tpu_custom_call.1} parent=5 // pred_check
        _
      $region30: #{tpu_custom_call.1} parent=5 // pred_check_branch
        %200 = sbr.rel (%p197) target = $region32
      $region31: #{tpu_custom_call.1} parent=5 // pred_region
        %s201 = ssub.s32 %s15, 1
        %s202 = sand.u32 %s28, 1
        %s203 = scalar_lea.sflag [#allocation3], %s202
        %s204 = sand.u32 %s28, 1
        %s205 = smul.addr %s204, 16
        %s206 = scalar_lea.vmem [#allocation2], %s205
        // Predicated region
        $region33: #{tpu_custom_call.1} parent=31 // pred_check
          %p207 = pneg %p41
        $region34: #{tpu_custom_call.1} parent=31 // pred_check_branch
          %209 = sbr.rel (%p207) target = $region36
        $region35: #{tpu_custom_call.1} parent=31 // pred_region
          %210 = dma.done %s203, 256
        $region36: #{tpu_custom_call.1} parent=31 // pred_fallthru
          _
        %s211 = sand.u32 %s20, 1
        %s212 = scalar_lea.sflag [#allocation5], %s211
        %s213 = sand.u32 %s54, 1
        %s214 = smul.addr %s213, 16
        %s215 = scalar_lea.vmem [#allocation4], %s214
        // Predicated region
        $region37: #{tpu_custom_call.1} parent=31 // pred_check
          %p216 = pneg %p67
        $region38: #{tpu_custom_call.1} parent=31 // pred_check_branch
          %218 = sbr.rel (%p216) target = $region40
        $region39: #{tpu_custom_call.1} parent=31 // pred_region
          %219 = dma.done %s212, 256
        $region40: #{tpu_custom_call.1} parent=31 // pred_fallthru
          _
        %s220 = sand.u32 %s20, 1
        %s221 = scalar_lea.sflag [#allocation5], %s220
        %s222 = sand.u32 %s80, 1
        %s223 = smul.addr %s222, 16
        %s224 = scalar_lea.vmem [#allocation6], %s223
        // Predicated region
        $region41: #{tpu_custom_call.1} parent=31 // pred_check
          %p225 = pneg %p93
        $region42: #{tpu_custom_call.1} parent=31 // pred_check_branch
          %227 = sbr.rel (%p225) target = $region44
        $region43: #{tpu_custom_call.1} parent=31 // pred_region
          %228 = dma.done %s221, 256
        $region44: #{tpu_custom_call.1} parent=31 // pred_fallthru
          _
        %s229 = sand.u32 %s28, 1
        %s230 = scalar_lea.sflag [#allocation3], %s229
        %s231 = sand.u32 %s28, 1
        %s232 = smul.addr %s231, 16
        %s233 = scalar_lea.vmem [#allocation2], %s232
        %p234 = pneg %p41
        %p235 = pneg %p38
        %s236 = sand.u32 %s20, 1
        %s237 = scalar_lea.sflag [#allocation5], %s236
        %s238 = sand.u32 %s54, 1
        %s239 = smul.addr %s238, 16
        %s240 = scalar_lea.vmem [#allocation4], %s239
        %p241 = pneg %p67
        %p242 = pneg %p64
        %s243 = sand.u32 %s20, 1
        %s244 = scalar_lea.sflag [#allocation5], %s243
        %s245 = sand.u32 %s80, 1
        %s246 = smul.addr %s245, 16
        %s247 = scalar_lea.vmem [#allocation6], %s246
        %p248 = pneg %p93
        %p249 = pneg %p90
        %p250 = pneg %p119
        %p251 = pneg %p116
        %s252 = sand.u32 %s106, 1
        %s253 = sand.u32 %s106, 1
        %s254 = smul.addr %s253, 24
        %s255 = scalar_lea.vmem [#allocation7], %s254
        %v256 = vld [vmem:[%s206] sm:$0xff]
        %v257 = vld [vmem:[%s206 + $0x8] sm:$0xff]
        %v258 = vadd.f32 %v256, %v257
        %259 = vadd.xlane.f32.xlu0 %v258
        %v260 = vpop.xlane.xlu0 %259
        %v261 = vrcp.pop 256.0
        %v262 = vmul.f32 %v260, %v261
        %vm263 = vcmask 7168
        %264 = vst.msk [vmem:[%s255] sm:$0xff] %vm263, %v262
        %v265 = vld [vmem:[%s215] sm:$0xff]
        %v266 = vld [vmem:[%s215 + $0x8] sm:$0xff]
        %v267 = vadd.f32 %v265, %v266
        %268 = vadd.xlane.f32.xlu0 %v267
        %v269 = vpop.xlane.xlu0 %268
        %v270 = vmul.f32 %v269, %v261
        %s271 = scalar_lea.vmem %s255, 8 [#allocation7]
        %272 = vst.msk [vmem:[%s271] sm:$0xff] %vm263, %v270
        %v273 = vld [vmem:[%s224] sm:$0xff]
        %v274 = vld [vmem:[%s224 + $0x8] sm:$0xff]
        %v275 = vadd.f32 %v273, %v274
        %276 = vadd.xlane.f32.xlu0 %v275
        %v277 = vpop.xlane.xlu0 %276
        %v278 = vmul.f32 %v277, %v261
        %s279 = scalar_lea.vmem %s255, 16 [#allocation7]
        %280 = vst.msk [vmem:[%s279] sm:$0xff] %vm263, %v278
        %s281 = sand.u32 %s106, 1
        %s282 = sand.u32 %s106, 1
        %s283 = smul.addr %s282, 24
        %s284 = scalar_lea.vmem [#allocation7], %s283
        // Predicated region
        $region45: #{tpu_custom_call.1} parent=31 // pred_check
          %p285 = pneg %p116
        $region46: #{tpu_custom_call.1} parent=31 // pred_check_branch
          %287 = sbr.rel (%p285) target = $region48
        $region47: #{tpu_custom_call.1} parent=31 // pred_region
          %s288 = smul.addr %s20, 8
          %s289 = scalar_lea.vmem %s3, %s288
          // Predicated region
          $region49: #{tpu_custom_call.1} parent=47 // pred_check
            _
          $region50: #{tpu_custom_call.1} parent=47 // pred_check_branch
            %291 = sbr.rel (0) target = $region52
          $region51: #{tpu_custom_call.1} parent=47 // pred_region
            // Predicated region
            $region53: #{tpu_custom_call.1} parent=51 // pred_check
              _
            $region54: #{tpu_custom_call.1} parent=51 // pred_check_branch
              %293 = sbr.rel (0) target = $region56
            $region55: #{tpu_custom_call.1} parent=51 // pred_region
              // Predicated region
              $region68: #{tpu_custom_call.1} parent=55 // pred_check
                _
              $region69: #{tpu_custom_call.1} parent=55 // pred_check_branch
                %313 = sbr.rel (0) target = $region71
              $region70: #{tpu_custom_call.1} parent=55 // pred_region
                loop: start=0, step=1, limit=1
                $region72: #{tpu_custom_call.1} parent=70 // loop_pre_header
                  _
                $region73: #{tpu_custom_call.1} parent=70 // loop_header
                  %s315 = sphi 0, %s319
                  %p316 = scmp.ge.s32.totalorder %s315, 1
                  %s320 = sphi %s284, %s284
                  %s321 = sphi %s289, %s289
                $region74: #{tpu_custom_call.1} parent=70 // loop_header_branch
                  %318 = sbr.rel (%p316) target = $region78
                $region75: #{tpu_custom_call.1} parent=70 // loop_body
                  %v322 = vld [vmem:[%s320] sm:$0xff]
                  %323 = vst [vmem:[%s321] sm:$0xff] %v322
                  %v324 = vld [vmem:[%s320 + $0x8] sm:$0xff]
                  %325 = vst [vmem:[%s321 + $0x10] sm:$0xff] %v324
                  %v326 = vld [vmem:[%s320 + $0x10] sm:$0xff]
                  %327 = vst [vmem:[%s321 + $0x20] sm:$0xff] %v326
                $region76: #{tpu_custom_call.1} parent=70 // loop_footer
                  %s319 = sadd.s32 1, %s315
                $region77: #{tpu_custom_call.1} parent=70 // loop_footer_branch
                  %314 = sbr.rel target = $region73
                $region78: #{tpu_custom_call.1} parent=70 // loop_exit
                  _
              $region71: #{tpu_custom_call.1} parent=55 // pred_fallthru
                _
              // Predicated region
              $region79: #{tpu_custom_call.1} parent=55 // pred_check
                _
              $region80: #{tpu_custom_call.1} parent=55 // pred_check_branch
                %329 = sbr.rel target = $region82
              $region81: #{tpu_custom_call.1} parent=55 // pred_region
                _
              $region82: #{tpu_custom_call.1} parent=55 // pred_fallthru
                _
            $region56: #{tpu_custom_call.1} parent=51 // pred_fallthru
              _
            // Predicated region
            $region57: #{tpu_custom_call.1} parent=51 // pred_check
              _
            $region58: #{tpu_custom_call.1} parent=51 // pred_check_branch
              %295 = sbr.rel target = $region60
            $region59: #{tpu_custom_call.1} parent=51 // pred_region
              %s297 = ssub.s32 256, 1
              loop: start=0, step=1, limit=1
              $region61: #{tpu_custom_call.1} parent=59 // loop_pre_header
                _
              $region62: #{tpu_custom_call.1} parent=59 // loop_header
                %s299 = sphi 0, %s303
                %p300 = scmp.ge.s32.totalorder %s299, 1
                %s304 = sphi %s284, %s284
                %s305 = sphi %s289, %s289
              $region63: #{tpu_custom_call.1} parent=59 // loop_header_branch
                %302 = sbr.rel (%p300) target = $region67
              $region64: #{tpu_custom_call.1} parent=59 // loop_body
                %v306 = vld [vmem:[%s304] sm:%s297]
                %307 = vst [vmem:[%s305] sm:%s297] %v306
                %v308 = vld [vmem:[%s304 + $0x8] sm:%s297]
                %309 = vst [vmem:[%s305 + $0x10] sm:%s297] %v308
                %v310 = vld [vmem:[%s304 + $0x10] sm:%s297]
                %311 = vst [vmem:[%s305 + $0x20] sm:%s297] %v310
              $region65: #{tpu_custom_call.1} parent=59 // loop_footer
                %s303 = sadd.s32 1, %s299
              $region66: #{tpu_custom_call.1} parent=59 // loop_footer_branch
                %298 = sbr.rel target = $region62
              $region67: #{tpu_custom_call.1} parent=59 // loop_exit
                _
            $region60: #{tpu_custom_call.1} parent=51 // pred_fallthru
              _
          $region52: #{tpu_custom_call.1} parent=47 // pred_fallthru
            _
          %330 = vnop
        $region48: #{tpu_custom_call.1} parent=31 // pred_fallthru
          _
      $region32: #{tpu_custom_call.1} parent=5 // pred_fallthru
        _
      %p331 = scmp.le.s32.totalorder 2, %s15
      // Predicated region
      $region83: #{tpu_custom_call.1} parent=5 // pred_check
        %p332 = pneg %p331
      $region84: #{tpu_custom_call.1} parent=5 // pred_check_branch
        %334 = sbr.rel (%p332) target = $region86
      $region85: #{tpu_custom_call.1} parent=5 // pred_region
        %s335 = ssub.s32 %s15, 2
        // Predicated region
        $region87: #{tpu_custom_call.1} parent=85 // pred_check
          %p336 = pneg %p122
        $region88: #{tpu_custom_call.1} parent=85 // pred_check_branch
          %338 = sbr.rel (%p336) target = $region90
        $region89: #{tpu_custom_call.1} parent=85 // pred_region
          %s339 = sand.u32 %s107, 1
          %s340 = sand.u32 %s107, 1
          %s341 = smul.addr %s340, 24
          %s342 = scalar_lea.vmem [#allocation7], %s341
        $region90: #{tpu_custom_call.1} parent=85 // pred_fallthru
          _
      $region86: #{tpu_custom_call.1} parent=5 // pred_fallthru
        _
    $region6: #{tpu_custom_call.1} parent=1 // loop_footer
      %s19 = sadd.s32 1, %s15
    $region7: #{tpu_custom_call.1} parent=1 // loop_footer_branch
      %14 = sbr.rel target = $region3
    $region8: #{tpu_custom_call.1} parent=1 // loop_exit
      _
    %343 = vsyncpa [#allocation3], 1
    %s344 = scalar_lea.sflag [#allocation3], 1
    %345 = vsyncpa %s344, 1
    %346 = vsyncpa [#allocation5], 1
    %s347 = scalar_lea.sflag [#allocation5], 1
    %348 = vsyncpa %s347, 1

</llo_original>
